<compile_context>
chip_gen: v5e
topology: v5e:2x2
jax: 0.10.0
libtpu: 0.0.40
codegen_flags: <defaults>
</compile_context>

<pallas_src>
import jax
import jax.numpy as jnp
from jax.experimental import pallas as pl
from jax.experimental.pallas import tpu as pltpu

LANE = 128                            # lane-padded width for hidden(3)/class(4)
VMEM_LIMIT = 48 * 1024 * 1024         # per-core budget, safe on v5e/v6e/v7x
XW_RESIDENT_BYTES = 16 * 1024 * 1024  # cap for a fully VMEM-resident XW (x2 buf)


def _round_up(x, m):
    return ((x + m - 1) // m) * m


def _select_tiles(n):
    """Pick (N_pad, TM, TK): big tiles for the mem-bound kernel, with the
    double-buffered working set well under v7x's 64 MiB/TC VMEM."""
    n8 = _round_up(n, 8)
    if n8 <= 1024:
        # Small graph: single tile; the kernel is overhead-bound anyway.
        return n8, n8, n8
    tm = 512
    n_pad = _round_up(n, tm)          # padding waste bounded by TM-1 rows/cols
    tk = 512
    for cand in (2048, 1024):         # biggest TK (<= 2 MiB bf16 A tile) dividing N_pad
        if n_pad % cand == 0:
            tk = cand
            break
    return n_pad, tm, tk


# ---------------------------------------------------------------------------
# Stage 1: XW = X @ W1   (row-tiled, lane-dense bf16 intermediate)
# ---------------------------------------------------------------------------
def xw_kernel(x_ref, w1_ref, xw_ref):
    xw_ref[...] = jnp.dot(
        x_ref[...], w1_ref[...], preferred_element_type=jnp.float32
    ).astype(xw_ref.dtype)


# ---------------------------------------------------------------------------
# Stage 2: accumulate A_hat @ XW directly into the resident f32 h output block
# (no scratch); at k == last: h = relu(h + b1) in place, z = h @ W2 + b2.
# ---------------------------------------------------------------------------
def make_agg_kernel(tk, xw_resident):
    def agg_kernel(a_ref, xw_ref, b1_ref, w2_ref, b2_ref, h_ref, z_ref):
        k = pl.program_id(1)

        @pl.when(k == 0)
        def _():
            h_ref[...] = jnp.zeros_like(h_ref)

        if xw_resident:
            start = pl.multiple_of(k * tk, tk)
            xw_blk = xw_ref[pl.ds(start, tk), :]     # slice the resident XW
        else:
            xw_blk = xw_ref[...]                      # streamed (TK, LANE) block

        h_ref[...] += jnp.dot(a_ref[...], xw_blk,
                              preferred_element_type=jnp.float32)

        @pl.when(k == pl.num_programs(1) - 1)
        def _():
            h = jnp.maximum(h_ref[...] + b1_ref[...], 0.0)
            h_ref[...] = h
            z_ref[...] = (
                jnp.dot(h.astype(jnp.bfloat16), w2_ref[...],
                        preferred_element_type=jnp.float32)
                + b2_ref[...]
            ).astype(z_ref.dtype)

    return agg_kernel


def build_normalized_adjacency_padded(edge_index, num_nodes, n_pad):
    """Dense padded bf16 A_hat = D^-1/2 (A + I) D^-1/2 (PyG gcn_norm semantics).

    Built directly at the tile-aligned (n_pad, n_pad) size in bf16, so no extra
    O(N^2) pad/cast pass runs before the aggregation kernel. Padded rows/cols
    are exactly zero (deg 0 -> scale 0), so they cannot pollute the result.
    Self-loops already present in edge_index stay at weight 1 (diag set, not added).
    """
    src, dst = edge_index[0], edge_index[1]
    a = jnp.zeros((n_pad, n_pad), dtype=jnp.float32)
    a = a.at[dst, src].set(1.0)                   # A[dst, src] = 1 (src -> dst)
    diag = jnp.arange(num_nodes)
    a = a.at[diag, diag].set(1.0)                 # add *remaining* self-loops
    deg = a.sum(axis=1)                           # padded rows have deg 0
    d_inv_sqrt = jnp.where(deg > 0, jax.lax.rsqrt(deg), 0.0)
    a_hat = d_inv_sqrt[:, None] * a * d_inv_sqrt[None, :]
    return a_hat.astype(jnp.bfloat16)


def gcn_forward(x, edge_index, w1, b1, w2, b2):
    """Returns (h, z) matching GCNConv(F,3)(x, edge_index).relu(); Linear(3,C)."""
    N, F = x.shape
    H = w1.shape[1]
    C = w2.shape[1]

    N_pad, TM, TK = _select_tiles(N)
    # Keep XW fully VMEM-resident (constant index_map) when cheap; fall back to
    # streamed (TK, LANE) blocks for very large graphs (v7x 64 MiB/TC budget).
    xw_resident = (2 * N_pad * LANE * 2) <= XW_RESIDENT_BYTES   # bf16, x2 buffers

    # ---- dense normalized adjacency, built directly padded + bf16 ----
    a_hat = build_normalized_adjacency_padded(edge_index, N, N_pad)

    # ---- zero-pad the small operands to lane-dense / tile-aligned shapes ----
    x_pad = jnp.zeros((N_pad, F), jnp.bfloat16).at[:N, :].set(x.astype(jnp.bfloat16))
    w1_pad = jnp.zeros((F, LANE), jnp.bfloat16).at[:, :H].set(w1.astype(jnp.bfloat16))
    b1_pad = jnp.zeros((1, LANE), jnp.float32).at[:, :H].set(b1)
    w2_pad = jnp.zeros((LANE, LANE), jnp.bfloat16).at[:H, :C].set(w2.astype(jnp.bfloat16))
    b2_pad = jnp.zeros((1, LANE), jnp.float32).at[:, :C].set(b2)

    # ---- stage 1: feature transform, lane-dense bf16 intermediate ----
    xw = pl.pallas_call(
        xw_kernel,
        out_shape=jax.ShapeDtypeStruct((N_pad, LANE), jnp.bfloat16),
        grid=(N_pad // TM,),
        in_specs=[
            pl.BlockSpec((TM, F), lambda i: (i, 0)),
            pl.BlockSpec((F, LANE), lambda i: (0, 0)),
        ],
        out_specs=pl.BlockSpec((TM, LANE), lambda i: (i, 0)),
        compiler_params=pltpu.CompilerParams(
            dimension_semantics=("parallel",)),
    )(x_pad, w1_pad)

    # ---- stage 2: tiled aggregation + fused bias / ReLU / output Linear ----
    if xw_resident:
        xw_spec = pl.BlockSpec((N_pad, LANE), lambda i, k: (0, 0))   # VMEM-resident
    else:
        xw_spec = pl.BlockSpec((TK, LANE), lambda i, k: (k, 0))      # streamed fallback

    h_pad, z_pad = pl.pallas_call(
        make_agg_kernel(TK, xw_resident),
        out_shape=(
            jax.ShapeDtypeStruct((N_pad, LANE), jnp.float32),
            jax.ShapeDtypeStruct((N_pad, LANE), jnp.float32),
        ),
        grid=(N_pad // TM, N_pad // TK),
        in_specs=[
            pl.BlockSpec((TM, TK), lambda i, k: (i, k)),      # A_hat tile (big, bf16)
            xw_spec,                                          # XW
            pl.BlockSpec((1, LANE), lambda i, k: (0, 0)),     # b1 (resident)
            pl.BlockSpec((LANE, LANE), lambda i, k: (0, 0)),  # W2 (resident, bf16)
            pl.BlockSpec((1, LANE), lambda i, k: (0, 0)),     # b2 (resident)
        ],
        out_specs=(
            pl.BlockSpec((TM, LANE), lambda i, k: (i, 0)),    # h (accumulator, resident over k)
            pl.BlockSpec((TM, LANE), lambda i, k: (i, 0)),    # z (resident over k)
        ),
        compiler_params=pltpu.CompilerParams(
            dimension_semantics=("parallel", "arbitrary"),
            vmem_limit_bytes=VMEM_LIMIT,
        ),
    )(a_hat, xw, b1_pad, w2_pad, b2_pad)

    # Slice the lane/row padding back off in the wrapper.
    return h_pad[:N, :H], z_pad[:N, :C]


if __name__ == "__main__":
    key = jax.random.PRNGKey(0)

    # Small synthetic "dataset": N nodes, F features, 4 classes, hidden=3 (per module).
    N = 16            # num nodes
    F = 16            # dataset.num_features
    HIDDEN = 3        # GCNConv output channels (fixed to 3 in the module)
    NUM_CLASSES = 4   # dataset.num_classes

    k_x, k_w1, k_b1, k_w2, k_b2 = jax.random.split(key, 5)

    # Node features.
    x = jax.random.normal(k_x, (N, F), dtype=jnp.float32)

    # Undirected ring graph, edges in both directions: edge_index [2, 2N].
    idx = jnp.arange(N, dtype=jnp.int32)
    nxt = (idx + 1) % N
    edge_index = jnp.stack([
        jnp.concatenate([idx, nxt]),   # sources
        jnp.concatenate([nxt, idx]),   # targets
    ], axis=0)

    # Deterministic parameter init (glorot-ish scaling).
    w1 = jax.random.normal(k_w1, (F, HIDDEN), dtype=jnp.float32) * (1.0 / jnp.sqrt(F))
    b1 = jax.random.normal(k_b1, (1, HIDDEN), dtype=jnp.float32) * 0.1
    w2 = jax.random.normal(k_w2, (HIDDEN, NUM_CLASSES), dtype=jnp.float32) * (1.0 / jnp.sqrt(HIDDEN))
    b2 = jax.random.normal(k_b2, (1, NUM_CLASSES), dtype=jnp.float32) * 0.1

    h, z = gcn_forward(x, edge_index, w1, b1, w2, b2)
    jax.block_until_ready((h, z))

    # Sanity: shapes match the PyTorch module's (h, z) outputs.
    assert h.shape == (N, HIDDEN)
    assert z.shape == (N, NUM_CLASSES)

    # Pure-JAX f32 reference (same gcn_norm semantics); loose tolerance since
    # A_hat / X / W1 / W2 stream in bf16 inside the kernels.
    src, dst = edge_index[0], edge_index[1]
    a_ref = jnp.zeros((N, N), jnp.float32).at[dst, src].set(1.0)
    a_ref = a_ref.at[jnp.arange(N), jnp.arange(N)].set(1.0)
    deg = a_ref.sum(axis=1)
    dis = jnp.where(deg > 0, jax.lax.rsqrt(deg), 0.0)
    a_hat_ref = dis[:, None] * a_ref * dis[None, :]
    h_ref = jnp.maximum(a_hat_ref @ (x @ w1) + b1, 0.0)
    z_ref = h_ref @ w2 + b2
    assert jnp.allclose(h, h_ref, atol=1e-1, rtol=1e-1)
    assert jnp.allclose(z, z_ref, atol=1e-1, rtol=1e-1)

    print("KERNEL_OK")
</pallas_src>

<mosaic_0001>
module attributes {stable_mosaic.version = 11 : i64} {
  func.func @xw_kernel(%arg0: i32, %arg1: memref<16x16xbf16, #tpu.memory_space<vmem>>, %arg2: memref<16x128xbf16, #tpu.memory_space<vmem>>, %arg3: memref<16x128xbf16, #tpu.memory_space<vmem>>) attributes {dimension_semantics = [#tpu.dimension_semantics<parallel>], iteration_bounds = array<i64: 1>, scalar_prefetch = 0 : i64, scratch_operands = 0 : i64, tpu.core_type = #tpu.core_type<tc>, window_params = [{transform_indices = @transform_0, window_bounds = array<i64: 16, 16>}, {pipeline_mode = #tpu.pipeline_mode<synchronous>, transform_indices = @transform_1, window_bounds = array<i64: 16, 128>}, {transform_indices = @transform_2, window_bounds = array<i64: 16, 128>}]} {
    %c0 = arith.constant 0 : index
    %c0_0 = arith.constant 0 : index
    %0 = vector.load %arg1[%c0, %c0_0] : memref<16x16xbf16, #tpu.memory_space<vmem>>, vector<16x16xbf16>
    %c0_1 = arith.constant 0 : index
    %c0_2 = arith.constant 0 : index
    %1 = vector.load %arg2[%c0_1, %c0_2] : memref<16x128xbf16, #tpu.memory_space<vmem>>, vector<16x128xbf16>
    %cst = arith.constant dense<0.000000e+00> : vector<16x128xf32>
    %2 = tpu.matmul %0, %1, %cst {dimension_numbers = #tpu.dot_dimension_numbers<[1], [0], [0], [1], [0, 0, 1, 1], [], []>} : vector<16x16xbf16>, vector<16x128xbf16>, vector<16x128xf32> -> vector<16x128xf32>
    %3 = arith.truncf %2 : vector<16x128xf32> to vector<16x128xbf16>
    %c0_3 = arith.constant 0 : index
    %c0_4 = arith.constant 0 : index
    %4 = vector.load %arg3[%c0_3, %c0_4] : memref<16x128xbf16, #tpu.memory_space<vmem>>, vector<16x128xbf16>
    tpu.vector_store %arg3[%c0_3, %c0_4], %3 {strides = array<i32>} : memref<16x128xbf16, #tpu.memory_space<vmem>>, vector<16x128xbf16>,
    return
  }
  func.func @transform_0(%arg0: i32) -> (i32, i32) {
    %c0_i32 = arith.constant 0 : i32
    %c0_i32_0 = arith.constant 0 : i32
    return %arg0, %c0_i32 : i32, i32
  }
  func.func @transform_1(%arg0: i32) -> (i32, i32) {
    %c0_i32 = arith.constant 0 : i32
    %c0_i32_0 = arith.constant 0 : i32
    %c0_i32_1 = arith.constant 0 : i32
    return %c0_i32, %c0_i32_0 : i32, i32
  }
  func.func @transform_2(%arg0: i32) -> (i32, i32) {
    %c0_i32 = arith.constant 0 : i32
    %c0_i32_0 = arith.constant 0 : i32
    return %arg0, %c0_i32 : i32, i32
  }
}

</mosaic_0001>

<llo_original>
// kernel: tpu_custom_call.1
$region0: #{tpu_custom_call.1}
  #allocation0 [shape = 'u32[]', space=smem, size = 0x4, offset = 0x4, fixed_abs, tag = 'smem constant byte address 0x4 - core index']
  #allocation1 [shape = 'u32[72,128]{1,0:T(1,128)}', space=vmem, size = 0x9000, scoped, tag = 'internal scratch']
  %s0 = inlined_call_operand.hbm [shape: bf16[16,16], index: 0, kind: input, shape index: {}]
  %s1 = inlined_call_operand.hbm [shape: bf16[16,128], index: 1, kind: input, shape index: {}]
  %s2 = inlined_call_operand.hbm [shape: bf16[16,128], index: 2, kind: output, shape index: {}]
  %s3 = sld [smem:[#allocation0]]
  $region26: #{tpu_custom_call.1} parent=0
    _
  %s5 = ssub.s32 1, %s3
  %s6 = scalar_select 0, %s5, %s3
  $region1: #{tpu_custom_call.1} parent=0
    #allocation2 [shape = 'u8[4096]{0}', space=vmem, size = 0x1000, scoped, tag = 'input window, operand 0, single buffered']
    #allocation3 [shape = 's32[1]{0}', space=sflag, size = 0x4, scoped, tag = 'scoped memory for tpu_custom_call.1']
    #allocation4 [shape = 's32[1]{0}', space=sflag, size = 0x4, scoped, tag = 'scoped memory for tpu_custom_call.1']
    #allocation5 [shape = 'u8[4096]{0}', space=vmem, size = 0x1000, scoped, tag = 'input window, operand 1, single buffered']
    #allocation6 [shape = 's32[1]{0}', space=sflag, size = 0x4, scoped, tag = 'scoped memory for tpu_custom_call.1']
    #allocation7 [shape = 'u8[4096]{0}', space=vmem, size = 0x1000, scoped, tag = 'output window, operand 0, single buffered']
    %7 = vsyncpa [#allocation3], 0
    %8 = vsyncpa [#allocation6], 0
    %9 = vsyncpa [#allocation4], 0
    // Predicated region
    $region2: #{tpu_custom_call.1} parent=1 // pred_check
      _
    $region3: #{tpu_custom_call.1} parent=1 // pred_check_branch
      %11 = sbr.rel (0) target = $region5
    $region4: #{tpu_custom_call.1} parent=1 // pred_region
      %13 = vsyncadd [#allocation3], 0
      %s14 = sshll.u32 %s0, 4
      %s15 = int_to_ptr.hbm [resolvable:$true] %s14
      %s16 = sshll.u32 [#allocation2], 4
      %s17 = int_to_ptr.vmem [resolvable:$true] %s16
      %22 = dma.hbm_to_vmem [thread:$0]  %s15, 128, %s17, [#allocation3], 64, 64, 4
    $region5: #{tpu_custom_call.1} parent=1 // pred_fallthru
      _
    // Predicated region
    $region6: #{tpu_custom_call.1} parent=1 // pred_check
      _
    $region7: #{tpu_custom_call.1} parent=1 // pred_check_branch
      %24 = sbr.rel (0) target = $region9
    $region8: #{tpu_custom_call.1} parent=1 // pred_region
      %26 = vsyncadd [#allocation6], 0
      %s27 = sshll.u32 %s1, 4
      %s28 = int_to_ptr.hbm [resolvable:$true] %s27
      %s29 = sshll.u32 [#allocation5], 4
      %s30 = int_to_ptr.vmem [resolvable:$true] %s29
      %35 = dma.hbm_to_vmem [thread:$0]  %s28, 128, %s30, [#allocation6], 64, 64, 4
    $region9: #{tpu_custom_call.1} parent=1 // pred_fallthru
      _
    // Predicated region
    $region10: #{tpu_custom_call.1} parent=1 // pred_check
      _
    $region11: #{tpu_custom_call.1} parent=1 // pred_check_branch
      %37 = sbr.rel (0) target = $region13
    $region12: #{tpu_custom_call.1} parent=1 // pred_region
      %39 = dma.done [#allocation3], 128
    $region13: #{tpu_custom_call.1} parent=1 // pred_fallthru
      _
    // Predicated region
    $region14: #{tpu_custom_call.1} parent=1 // pred_check
      _
    $region15: #{tpu_custom_call.1} parent=1 // pred_check_branch
      %41 = sbr.rel (0) target = $region17
    $region16: #{tpu_custom_call.1} parent=1 // pred_region
      %43 = dma.done [#allocation6], 128
    $region17: #{tpu_custom_call.1} parent=1 // pred_fallthru
      _
    %v45 = vld [vmem:[#allocation2] sm:$0xf]
    %v46 = vld [vmem:[#allocation2 + $0x4] sm:$0xf]
    %v47 = vld [vmem:[#allocation5] sm:$0xf]
    %v48 = vld [vmem:[#allocation5 + $0x4] sm:$0xf]
    %v51 = vunpack.c.l.b16 %v45
    %v52 = vunpack.c.l.b16 %v46
    %v53 = vpack.c.b16 %v52, %v51
    %v56 = vunpack.c.l.b16 %v47
    %v57 = vunpack.c.l.b16 %v48
    %v58 = vpack.c.b16 %v57, %v56
    %vm60 = vcmask 130048
    %v62 = vsel %vm60, %v53, 0
    %64 = vmatpush.bf16.msra.mxu0 0
    %65 = vmatpush.bf16.msra.mxu0 0
    %66 = vmatpush.bf16.msra.mxu0 0
    %67 = vmatpush.bf16.msra.mxu0 0
    %68 = vmatpush.bf16.msra.mxu0 0
    %69 = vmatpush.bf16.msra.mxu0 0
    %70 = vmatpush.bf16.msra.mxu0 0
    %71 = vmatpush.bf16.msra.mxu0 %v58
    %72 = vmatmul.bf16.gmra.mxu0 %v62
    %v73 = vpop.f32.mrf.mxu0
    %v74 = vadd.f32 0.0, %v73
    %v75 = vpop.f32.mrf.mxu0
    %v76 = vadd.f32 0.0, %v75
    %77 = vdwg.mxu0
    %v78 = vpack.c.bf16 %v74, %v74
    %v79 = vpack.c.bf16 %v76, %v76
    %80 = vst [vmem:[#allocation7] sm:$0xf] %v78
    %81 = vst [vmem:[#allocation7 + $0x4] sm:$0xf] %v79
    // Predicated region
    $region18: #{tpu_custom_call.1} parent=1 // pred_check
      _
    $region19: #{tpu_custom_call.1} parent=1 // pred_check_branch
      %83 = sbr.rel (0) target = $region21
    $region20: #{tpu_custom_call.1} parent=1 // pred_region
      %85 = vsyncadd [#allocation4], 0
      %s86 = sshll.u32 [#allocation7], 4
      %s87 = int_to_ptr.vmem [resolvable:$true] %s86
      %s88 = sshll.u32 %s2, 4
      %s89 = int_to_ptr.hbm [resolvable:$true] %s88
      %94 = dma.vmem_to_hbm [thread:$0]  %s87, 128, %s89, [#allocation4], 64, 64, 4
    $region21: #{tpu_custom_call.1} parent=1 // pred_fallthru
      _
    // Predicated region
    $region22: #{tpu_custom_call.1} parent=1 // pred_check
      _
    $region23: #{tpu_custom_call.1} parent=1 // pred_check_branch
      %96 = sbr.rel (0) target = $region25
    $region24: #{tpu_custom_call.1} parent=1 // pred_region
      %98 = dma.done [#allocation4], 128
    $region25: #{tpu_custom_call.1} parent=1 // pred_fallthru
      _
    %99 = vsyncpa [#allocation3], 1
    %100 = vsyncpa [#allocation6], 1
    %101 = vsyncpa [#allocation4], 1

</llo_original>
